<compile_context>
chip_gen: v5e
topology: v5e:2x2
jax: 0.10.0
libtpu: 0.0.40
codegen_flags: <defaults>
</compile_context>

<pallas_src>
import functools

import jax
import jax.numpy as jnp
from jax.experimental import pallas as pl
from jax.experimental.pallas import tpu as pltpu


def _round_up(v, m):
    return v + (-v) % m


def _tile_plan(in_features, rep, tk_cap=1792):
    """Tile plan shared by param prep and forward so padded shapes agree."""
    rep_p = _round_up(rep, 128)
    if in_features % 128 == 0:
        # Largest multiple-of-128 divisor of in_features not exceeding tk_cap:
        # the K grid divides exactly => no K padding ever (12544 -> 1792).
        n128 = in_features // 128
        best = 1
        for d in range(1, n128 + 1):
            if n128 % d == 0 and d * 128 <= tk_cap:
                best = d
        tk = best * 128
        k_p = in_features
    else:
        # Fallback: zero-pad K (both x and w6) up to a multiple of tk.
        tk = min(tk_cap, _round_up(in_features, 128))
        k_p = _round_up(in_features, tk)
    return tk, k_p, rep_p


def _two_mlp_head_kernel(x_ref, w6_ref, b6_ref, w7_ref, b7_ref, o_ref, acc_ref):
    """One (tm, tk) x-tile step of the K-tiled fc6, with fused fc7 epilogue."""
    k = pl.program_id(1)

    # fc6 partial product on the MXU; x is cast to the weight dtype per tile
    # (cheap VPU work hidden under the w6 slab DMA), accumulation stays f32.
    part = jnp.dot(x_ref[...].astype(w6_ref.dtype), w6_ref[...],
                   preferred_element_type=jnp.float32)

    @pl.when(k == 0)
    def _():
        acc_ref[...] = part          # assign on first K step: no zero-init pass

    @pl.when(k > 0)
    def _():
        acc_ref[...] += part

    @pl.when(k == pl.num_programs(1) - 1)
    def _():
        # f32 bias + ReLU epilogue for fc6 (v5e-safe VPU path), then fc7 on the
        # MXU with bf16 operands / f32 accumulation, bias + ReLU, store.
        h = jnp.maximum(acc_ref[...] + b6_ref[...], 0.0)
        y = jnp.dot(h.astype(w7_ref.dtype), w7_ref[...],
                    preferred_element_type=jnp.float32)
        o_ref[...] = jnp.maximum(y + b7_ref[...], 0.0).astype(o_ref.dtype)


def prepare_two_mlp_head_params(w6, b6, w7, b7, compute_dtype=jnp.bfloat16):
    """ONE-TIME parameter prep (call at model setup, outside the hot forward path).

    Transposes nn.Linear weights (out, in) -> (in, out), casts MXU operands to
    `compute_dtype`, zero-pads to tile-aligned shapes, keeps biases in f32.
    Returns {"arrays": traced pytree, "static": python-int metadata}.
    """
    rep, in_features = w6.shape
    tk, k_p, rep_p = _tile_plan(in_features, rep)

    w6_t = jnp.zeros((k_p, rep_p), compute_dtype).at[:in_features, :rep].set(
        jnp.transpose(w6).astype(compute_dtype))
    w7_t = jnp.zeros((rep_p, rep_p), compute_dtype).at[:rep, :rep].set(
        jnp.transpose(w7).astype(compute_dtype))
    b6_p = jnp.zeros((1, rep_p), jnp.float32).at[0, :rep].set(b6.astype(jnp.float32))
    b7_p = jnp.zeros((1, rep_p), jnp.float32).at[0, :rep].set(b7.astype(jnp.float32))

    return {
        "arrays": {"w6_t": w6_t, "b6": b6_p, "w7_t": w7_t, "b7": b7_p},
        "static": {"in_features": int(in_features), "rep": int(rep), "tk": int(tk)},
    }


@functools.partial(jax.jit, static_argnames=("in_features", "rep", "tk", "tm_max"))
def _two_mlp_head_impl(x, w6_t, b6, w7_t, b7, *, in_features, rep, tk, tm_max):
    n = x.shape[0]
    x_flat = x.reshape(n, -1)              # == torch flatten(start_dim=1) on NCHW
    k_p, rep_p = w6_t.shape

    # ROI tile: as big as tm_max, but when N is small keep >= 2 M tiles so both
    # v7x TensorCores get work; 16-row aligned for bf16 sublane packing.
    tm = max(16, min(tm_max, _round_up((n + 1) // 2, 16)))
    m_p = _round_up(n, tm)

    # Pad only what is needed (M, plus K only in the in_features % 128 != 0
    # fallback); keep x's native dtype -- bf16 cast is per-tile inside the kernel.
    pad_m, pad_k = m_p - n, k_p - in_features
    x_p = x_flat if (pad_m == 0 and pad_k == 0) else jnp.pad(
        x_flat, ((0, pad_m), (0, pad_k)))

    grid = (m_p // tm, k_p // tk)

    # Advisory cost so XLA schedules the ROI-align producer / head consumers
    # around this long custom call.
    w_item = jnp.dtype(w6_t.dtype).itemsize
    x_item = jnp.dtype(x.dtype).itemsize
    cost = pl.CostEstimate(
        flops=2 * m_p * rep_p * (k_p + rep_p),
        transcendentals=0,
        bytes_accessed=(m_p * k_p * x_item                 # x read
                        + grid[0] * k_p * rep_p * w_item   # w6 re-read per M tile
                        + rep_p * rep_p * w_item           # w7 (resident)
                        + m_p * rep_p * x_item),           # output write
    )

    out_p = pl.pallas_call(
        _two_mlp_head_kernel,
        out_shape=jax.ShapeDtypeStruct((m_p, rep_p), x.dtype),
        grid_spec=pltpu.PrefetchScalarGridSpec(
            num_scalar_prefetch=0,
            grid=grid,
            in_specs=[
                pl.BlockSpec((tm, tk), lambda i, k: (i, k)),        # x tile (streamed)
                pl.BlockSpec((tk, rep_p), lambda i, k: (k, 0)),     # w6 slab (streamed over K)
                pl.BlockSpec((1, rep_p), lambda i, k: (0, 0)),      # b6 (resident)
                pl.BlockSpec((rep_p, rep_p), lambda i, k: (0, 0)),  # w7 (resident)
                pl.BlockSpec((1, rep_p), lambda i, k: (0, 0)),      # b7 (resident)
            ],
            out_specs=pl.BlockSpec((tm, rep_p), lambda i, k: (i, 0)),
            scratch_shapes=[pltpu.VMEM((tm, rep_p), jnp.float32)],  # fc6 f32 accumulator
        ),
        compiler_params=pltpu.CompilerParams(
            # ROI axis parallel (v7x megacore); K reduction trailing + arbitrary
            # (the output-resident accumulator pattern relies on this ordering).
            dimension_semantics=("parallel", "arbitrary"),
            # ~26 MiB working set at tm=512/tk=1792/rep=1024; 48 MiB scoped budget
            # leaves headroom on v7x's 64 MiB physical VMEM and is trivially fine
            # on v5e/v6e (128 MiB).
            vmem_limit_bytes=48 * 1024 * 1024,
        ),
        cost_estimate=cost,
    )(x_p, w6_t, b6, w7_t, b7)

    return out_p[:n, :rep]


def two_mlp_head(x, params, *, tm_max=512):
    """Pallas TwoMLPHead forward.

    Args:
      x:      (N, C, H, W) input (NCHW, same as PyTorch).
      params: output of prepare_two_mlp_head_params().
      tm_max: max ROI-tile size (512 amortizes the w6 stream; MXU-friendly).
    Returns:
      (N, representation_size) array with x's dtype.
    """
    a, s = params["arrays"], params["static"]
    return _two_mlp_head_impl(x, a["w6_t"], a["b6"], a["w7_t"], a["b7"],
                              in_features=s["in_features"], rep=s["rep"],
                              tk=s["tk"], tm_max=tm_max)


def two_mlp_head_ref(x, w6, b6, w7, b7):
    """Pure-JAX f32 reference matching the PyTorch forward."""
    n = x.shape[0]
    xf = x.reshape(n, -1)
    h = jnp.maximum(xf @ w6.T + b6, 0.0)
    return jnp.maximum(h @ w7.T + b7, 0.0)


if __name__ == "__main__":
    # Small shapes consistent with the module: NCHW pooled ROI features.
    N, C, H, W = 2, 4, 16, 16
    in_channels = C * H * W            # 1024
    representation_size = 128

    key = jax.random.PRNGKey(0)
    kx, k6w, k6b, k7w, k7b = jax.random.split(key, 5)

    x = jax.random.normal(kx, (N, C, H, W), dtype=jnp.float32)
    # nn.Linear parameter shapes: weight (out, in), bias (out,).
    w6 = jax.random.normal(k6w, (representation_size, in_channels), jnp.float32) * 0.02
    b6 = jax.random.normal(k6b, (representation_size,), jnp.float32) * 0.02
    w7 = jax.random.normal(k7w, (representation_size, representation_size), jnp.float32) * 0.02
    b7 = jax.random.normal(k7b, (representation_size,), jnp.float32) * 0.02

    # One-time param prep (transpose + bf16 cast + padding) outside the hot path.
    params = prepare_two_mlp_head_params(w6, b6, w7, b7)

    out = two_mlp_head(x, params)
    out = jax.block_until_ready(out)

    ref = two_mlp_head_ref(x, w6, b6, w7, b7)
    assert out.shape == (N, representation_size)
    # Tolerance accounts for bf16 MXU operands with f32 accumulation.
    assert jnp.allclose(out, ref, atol=2e-2, rtol=2e-2), "mismatch vs reference"

    print("KERNEL_OK")
</pallas_src>

<mosaic_0001>
module attributes {stable_mosaic.version = 11 : i64} {
  func.func @_two_mlp_head_kernel(%arg0: i32, %arg1: i32, %arg2: memref<16x1024xf32, #tpu.memory_space<vmem>>, %arg3: memref<1024x128xbf16, #tpu.memory_space<vmem>>, %arg4: memref<1x128xf32, #tpu.memory_space<vmem>>, %arg5: memref<128x128xbf16, #tpu.memory_space<vmem>>, %arg6: memref<1x128xf32, #tpu.memory_space<vmem>>, %arg7: memref<16x128xf32, #tpu.memory_space<vmem>>, %arg8: memref<16x128xf32, #tpu.memory_space<vmem>>) attributes {dimension_semantics = [#tpu.dimension_semantics<parallel>, #tpu.dimension_semantics<arbitrary>], iteration_bounds = array<i64: 1, 1>, scalar_prefetch = 0 : i64, scratch_operands = 1 : i64, tpu.core_type = #tpu.core_type<tc>, window_params = [{transform_indices = @transform_0, window_bounds = array<i64: 16, 1024>}, {transform_indices = @transform_1, window_bounds = array<i64: 1024, 128>}, {pipeline_mode = #tpu.pipeline_mode<synchronous>, transform_indices = @transform_2, window_bounds = array<i64: 1, 128>}, {pipeline_mode = #tpu.pipeline_mode<synchronous>, transform_indices = @transform_3, window_bounds = array<i64: 128, 128>}, {pipeline_mode = #tpu.pipeline_mode<synchronous>, transform_indices = @transform_4, window_bounds = array<i64: 1, 128>}, {transform_indices = @transform_5, window_bounds = array<i64: 16, 128>}]} {
    %c0 = arith.constant 0 : index
    %c0_0 = arith.constant 0 : index
    %0 = vector.load %arg2[%c0, %c0_0] : memref<16x1024xf32, #tpu.memory_space<vmem>>, vector<16x1024xf32>
    %1 = arith.truncf %0 : vector<16x1024xf32> to vector<16x1024xbf16>
    %c0_1 = arith.constant 0 : index
    %c0_2 = arith.constant 0 : index
    %2 = vector.load %arg3[%c0_1, %c0_2] : memref<1024x128xbf16, #tpu.memory_space<vmem>>, vector<1024x128xbf16>
    %cst = arith.constant dense<0.000000e+00> : vector<16x128xf32>
    %3 = tpu.matmul %1, %2, %cst {dimension_numbers = #tpu.dot_dimension_numbers<[1], [0], [0], [1], [0, 0, 1, 1], [], []>} : vector<16x1024xbf16>, vector<1024x128xbf16>, vector<16x128xf32> -> vector<16x128xf32>
    %c0_i32 = arith.constant 0 : i32
    %4 = arith.cmpi eq, %arg1, %c0_i32 : i32
    %5 = arith.extui %4 : i1 to i32
    %c0_i32_3 = arith.constant 0 : i32
    %6 = arith.cmpi ne, %5, %c0_i32_3 : i32
    scf.if %6 {
      %c0_8 = arith.constant 0 : index
      %c0_9 = arith.constant 0 : index
      %13 = vector.load %arg8[%c0_8, %c0_9] : memref<16x128xf32, #tpu.memory_space<vmem>>, vector<16x128xf32>
      tpu.vector_store %arg8[%c0_8, %c0_9], %3 {strides = array<i32>} : memref<16x128xf32, #tpu.memory_space<vmem>>, vector<16x128xf32>,
    } else {
    }
    %c0_i32_4 = arith.constant 0 : i32
    %7 = arith.cmpi sgt, %arg1, %c0_i32_4 : i32
    %8 = arith.extui %7 : i1 to i32
    %c0_i32_5 = arith.constant 0 : i32
    %9 = arith.cmpi ne, %8, %c0_i32_5 : i32
    scf.if %9 {
      %c0_8 = arith.constant 0 : index
      %c0_9 = arith.constant 0 : index
      %13 = vector.load %arg8[%c0_8, %c0_9] : memref<16x128xf32, #tpu.memory_space<vmem>>, vector<16x128xf32>
      %14 = arith.addf %13, %3 : vector<16x128xf32>
      %c0_10 = arith.constant 0 : index
      %c0_11 = arith.constant 0 : index
      %15 = vector.load %arg8[%c0_10, %c0_11] : memref<16x128xf32, #tpu.memory_space<vmem>>, vector<16x128xf32>
      tpu.vector_store %arg8[%c0_10, %c0_11], %14 {strides = array<i32>} : memref<16x128xf32, #tpu.memory_space<vmem>>, vector<16x128xf32>,
    } else {
    }
    %c0_i32_6 = arith.constant 0 : i32
    %10 = arith.cmpi eq, %arg1, %c0_i32_6 : i32
    %11 = arith.extui %10 : i1 to i32
    %c0_i32_7 = arith.constant 0 : i32
    %12 = arith.cmpi ne, %11, %c0_i32_7 : i32
    scf.if %12 {
      %c0_8 = arith.constant 0 : index
      %c0_9 = arith.constant 0 : index
      %13 = vector.load %arg8[%c0_8, %c0_9] : memref<16x128xf32, #tpu.memory_space<vmem>>, vector<16x128xf32>
      %c0_10 = arith.constant 0 : index
      %c0_11 = arith.constant 0 : index
      %14 = vector.load %arg4[%c0_10, %c0_11] : memref<1x128xf32, #tpu.memory_space<vmem>>, vector<1x128xf32>
      %15 = vector.broadcast %14 : vector<1x128xf32> to vector<16x128xf32>
      %16 = arith.addf %13, %15 : vector<16x128xf32>
      %cst_12 = arith.constant 0.000000e+00 : f32
      %17 = vector.broadcast %cst_12 : f32 to vector<16x128xf32>
      %18 = arith.maximumf %16, %17 : vector<16x128xf32>
      %19 = arith.truncf %18 : vector<16x128xf32> to vector<16x128xbf16>
      %c0_13 = arith.constant 0 : index
      %c0_14 = arith.constant 0 : index
      %20 = vector.load %arg5[%c0_13, %c0_14] : memref<128x128xbf16, #tpu.memory_space<vmem>>, vector<128x128xbf16>
      %cst_15 = arith.constant dense<0.000000e+00> : vector<16x128xf32>
      %21 = tpu.matmul %19, %20, %cst_15 {dimension_numbers = #tpu.dot_dimension_numbers<[1], [0], [0], [1], [0, 0, 1, 1], [], []>} : vector<16x128xbf16>, vector<128x128xbf16>, vector<16x128xf32> -> vector<16x128xf32>
      %c0_16 = arith.constant 0 : index
      %c0_17 = arith.constant 0 : index
      %22 = vector.load %arg6[%c0_16, %c0_17] : memref<1x128xf32, #tpu.memory_space<vmem>>, vector<1x128xf32>
      %23 = vector.broadcast %22 : vector<1x128xf32> to vector<16x128xf32>
      %24 = arith.addf %21, %23 : vector<16x128xf32>
      %cst_18 = arith.constant 0.000000e+00 : f32
      %25 = vector.broadcast %cst_18 : f32 to vector<16x128xf32>
      %26 = arith.maximumf %24, %25 : vector<16x128xf32>
      %c0_19 = arith.constant 0 : index
      %c0_20 = arith.constant 0 : index
      %27 = vector.load %arg7[%c0_19, %c0_20] : memref<16x128xf32, #tpu.memory_space<vmem>>, vector<16x128xf32>
      tpu.vector_store %arg7[%c0_19, %c0_20], %26 {strides = array<i32>} : memref<16x128xf32, #tpu.memory_space<vmem>>, vector<16x128xf32>,
    } else {
    }
    return
  }
  func.func @transform_0(%arg0: i32, %arg1: i32) -> (i32, i32) {
    %c0_i32 = arith.constant 0 : i32
    return %arg0, %arg1 : i32, i32
  }
  func.func @transform_1(%arg0: i32, %arg1: i32) -> (i32, i32) {
    %c0_i32 = arith.constant 0 : i32
    %c0_i32_0 = arith.constant 0 : i32
    return %arg1, %c0_i32 : i32, i32
  }
  func.func @transform_2(%arg0: i32, %arg1: i32) -> (i32, i32) {
    %c0_i32 = arith.constant 0 : i32
    %c0_i32_0 = arith.constant 0 : i32
    %c0_i32_1 = arith.constant 0 : i32
    return %c0_i32, %c0_i32_0 : i32, i32
  }
  func.func @transform_3(%arg0: i32, %arg1: i32) -> (i32, i32) {
    %c0_i32 = arith.constant 0 : i32
    %c0_i32_0 = arith.constant 0 : i32
    %c0_i32_1 = arith.constant 0 : i32
    return %c0_i32, %c0_i32_0 : i32, i32
  }
  func.func @transform_4(%arg0: i32, %arg1: i32) -> (i32, i32) {
    %c0_i32 = arith.constant 0 : i32
    %c0_i32_0 = arith.constant 0 : i32
    %c0_i32_1 = arith.constant 0 : i32
    return %c0_i32, %c0_i32_0 : i32, i32
  }
  func.func @transform_5(%arg0: i32, %arg1: i32) -> (i32, i32) {
    %c0_i32 = arith.constant 0 : i32
    %c0_i32_0 = arith.constant 0 : i32
    return %arg0, %c0_i32 : i32, i32
  }
}

</mosaic_0001>

<llo_original>
// kernel: _two_mlp_head_impl.1
$region0: #{_two_mlp_head_impl.1}
  #allocation0 [shape = 'u32[]', space=smem, size = 0x4, offset = 0x4, fixed_abs, tag = 'smem constant byte address 0x4 - core index']
  #allocation1 [shape = 'u32[72,128]{1,0:T(1,128)}', space=vmem, size = 0x9000, scoped, tag = 'internal scratch']
  #allocation2 [shape = 'f32[16,128]{1,0:T(8,128)}', space=vmem, size = 0x2000, scoped, tag = 'scratch operand']
  %s0 = inlined_call_operand.vmem [shape: f32[16,1024], index: 0, kind: input, shape index: {}]
  %s1 = inlined_call_operand.hbm [shape: bf16[1024,128], index: 1, kind: input, shape index: {}]
  %s2 = inlined_call_operand.vmem [shape: f32[1,128], index: 2, kind: input, shape index: {}]
  %s3 = inlined_call_operand.vmem [shape: bf16[128,128], index: 3, kind: input, shape index: {}]
  %s4 = inlined_call_operand.vmem [shape: f32[1,128], index: 4, kind: input, shape index: {}]
  %s5 = inlined_call_operand.vmem [shape: f32[16,128], index: 5, kind: output, shape index: {}]
  %s6 = sld [smem:[#allocation0]]
  $region46: #{_two_mlp_head_impl.1} parent=0
    _
  %s8 = ssub.s32 1, %s6
  %s9 = scalar_select 0, %s8, %s6
  $region1: #{_two_mlp_head_impl.1} parent=0
    #allocation3 [shape = 'u8[262144]{0}', space=vmem, size = 0x40000, scoped, tag = 'input window, operand 1, single buffered']
    #allocation4 [shape = 's32[1]{0}', space=sflag, size = 0x4, scoped, tag = 'scoped memory for _two_mlp_head_impl.1']
    %10 = vsyncpa [#allocation4], 0
    // Predicated region
    $region2: #{_two_mlp_head_impl.1} parent=1 // pred_check
      _
    $region3: #{_two_mlp_head_impl.1} parent=1 // pred_check_branch
      %12 = sbr.rel (0) target = $region5
    $region4: #{_two_mlp_head_impl.1} parent=1 // pred_region
      _
    $region5: #{_two_mlp_head_impl.1} parent=1 // pred_fallthru
      _
    // Predicated region
    $region6: #{_two_mlp_head_impl.1} parent=1 // pred_check
      _
    $region7: #{_two_mlp_head_impl.1} parent=1 // pred_check_branch
      %14 = sbr.rel (0) target = $region9
    $region8: #{_two_mlp_head_impl.1} parent=1 // pred_region
      %16 = vsyncadd [#allocation4], 0
      %s17 = sshll.u32 %s1, 4
      %s18 = int_to_ptr.hbm [resolvable:$true] %s17
      %s19 = sshll.u32 [#allocation3], 4
      %s20 = int_to_ptr.vmem [resolvable:$true] %s19
      %25 = dma.hbm_to_vmem [thread:$0]  %s18, 8192, %s20, [#allocation4], 64, 64, 4
    $region9: #{_two_mlp_head_impl.1} parent=1 // pred_fallthru
      _
    // Predicated region
    $region10: #{_two_mlp_head_impl.1} parent=1 // pred_check
      _
    $region11: #{_two_mlp_head_impl.1} parent=1 // pred_check_branch
      %27 = sbr.rel (0) target = $region13
    $region12: #{_two_mlp_head_impl.1} parent=1 // pred_region
      _
    $region13: #{_two_mlp_head_impl.1} parent=1 // pred_fallthru
      _
    // Predicated region
    $region14: #{_two_mlp_head_impl.1} parent=1 // pred_check
      _
    $region15: #{_two_mlp_head_impl.1} parent=1 // pred_check_branch
      %29 = sbr.rel (0) target = $region17
    $region16: #{_two_mlp_head_impl.1} parent=1 // pred_region
      _
    $region17: #{_two_mlp_head_impl.1} parent=1 // pred_fallthru
      _
    // Predicated region
    $region18: #{_two_mlp_head_impl.1} parent=1 // pred_check
      _
    $region19: #{_two_mlp_head_impl.1} parent=1 // pred_check_branch
      %31 = sbr.rel (0) target = $region21
    $region20: #{_two_mlp_head_impl.1} parent=1 // pred_region
      _
    $region21: #{_two_mlp_head_impl.1} parent=1 // pred_fallthru
      _
    // Predicated region
    $region22: #{_two_mlp_head_impl.1} parent=1 // pred_check
      _
    $region23: #{_two_mlp_head_impl.1} parent=1 // pred_check_branch
      %33 = sbr.rel (0) target = $region25
    $region24: #{_two_mlp_head_impl.1} parent=1 // pred_region
      %35 = dma.done [#allocation4], 8192
    $region25: #{_two_mlp_head_impl.1} parent=1 // pred_fallthru
      _
    %v36 = vld [vmem:[%s0] sm:$0xff]
    %v37 = vld [vmem:[%s0 + $0x8] sm:$0xff]
    %v38 = vld [vmem:[%s0 + $0x10] sm:$0xff]
    %v39 = vld [vmem:[%s0 + $0x18] sm:$0xff]
    %v40 = vld [vmem:[%s0 + $0x20] sm:$0xff]
    %v41 = vld [vmem:[%s0 + $0x28] sm:$0xff]
    %v42 = vld [vmem:[%s0 + $0x30] sm:$0xff]
    %v43 = vld [vmem:[%s0 + $0x38] sm:$0xff]
    %v44 = vld [vmem:[%s0 + $0x40] sm:$0xff]
    %v45 = vld [vmem:[%s0 + $0x48] sm:$0xff]
    %v46 = vld [vmem:[%s0 + $0x50] sm:$0xff]
    %v47 = vld [vmem:[%s0 + $0x58] sm:$0xff]
    %v48 = vld [vmem:[%s0 + $0x60] sm:$0xff]
    %v49 = vld [vmem:[%s0 + $0x68] sm:$0xff]
    %v50 = vld [vmem:[%s0 + $0x70] sm:$0xff]
    %v51 = vld [vmem:[%s0 + $0x78] sm:$0xff]
    %v52 = vpack.c.bf16 %v44, %v36
    %v53 = vpack.c.bf16 %v45, %v37
    %v54 = vpack.c.bf16 %v46, %v38
    %v55 = vpack.c.bf16 %v47, %v39
    %v56 = vpack.c.bf16 %v48, %v40
    %v57 = vpack.c.bf16 %v49, %v41
    %v58 = vpack.c.bf16 %v50, %v42
    %v59 = vpack.c.bf16 %v51, %v43
    %v60 = vld [vmem:[#allocation3] sm:$0xf]
    %v61 = vld [vmem:[#allocation3 + $0x4] sm:$0xf]
    %v62 = vld [vmem:[#allocation3 + $0x8] sm:$0xf]
    %v63 = vld [vmem:[#allocation3 + $0xc] sm:$0xf]
    %v64 = vld [vmem:[#allocation3 + $0x10] sm:$0xf]
    %v65 = vld [vmem:[#allocation3 + $0x14] sm:$0xf]
    %v66 = vld [vmem:[#allocation3 + $0x18] sm:$0xf]
    %v67 = vld [vmem:[#allocation3 + $0x1c] sm:$0xf]
    %v68 = vld [vmem:[#allocation3 + $0x20] sm:$0xf]
    %v69 = vld [vmem:[#allocation3 + $0x24] sm:$0xf]
    %v70 = vld [vmem:[#allocation3 + $0x28] sm:$0xf]
    %v71 = vld [vmem:[#allocation3 + $0x2c] sm:$0xf]
    %v72 = vld [vmem:[#allocation3 + $0x30] sm:$0xf]
    %v73 = vld [vmem:[#allocation3 + $0x34] sm:$0xf]
    %v74 = vld [vmem:[#allocation3 + $0x38] sm:$0xf]
    %v75 = vld [vmem:[#allocation3 + $0x3c] sm:$0xf]
    %v76 = vld [vmem:[#allocation3 + $0x40] sm:$0xf]
    %v77 = vld [vmem:[#allocation3 + $0x44] sm:$0xf]
    %v78 = vld [vmem:[#allocation3 + $0x48] sm:$0xf]
    %v79 = vld [vmem:[#allocation3 + $0x4c] sm:$0xf]
    %v80 = vld [vmem:[#allocation3 + $0x50] sm:$0xf]
    %v81 = vld [vmem:[#allocation3 + $0x54] sm:$0xf]
    %v82 = vld [vmem:[#allocation3 + $0x58] sm:$0xf]
    %v83 = vld [vmem:[#allocation3 + $0x5c] sm:$0xf]
    %v84 = vld [vmem:[#allocation3 + $0x60] sm:$0xf]
    %v85 = vld [vmem:[#allocation3 + $0x64] sm:$0xf]
    %v86 = vld [vmem:[#allocation3 + $0x68] sm:$0xf]
    %v87 = vld [vmem:[#allocation3 + $0x6c] sm:$0xf]
    %v88 = vld [vmem:[#allocation3 + $0x70] sm:$0xf]
    %v89 = vld [vmem:[#allocation3 + $0x74] sm:$0xf]
    %v90 = vld [vmem:[#allocation3 + $0x78] sm:$0xf]
    %v91 = vld [vmem:[#allocation3 + $0x7c] sm:$0xf]
    %v92 = vld [vmem:[#allocation3 + $0x80] sm:$0xf]
    %v93 = vld [vmem:[#allocation3 + $0x84] sm:$0xf]
    %v94 = vld [vmem:[#allocation3 + $0x88] sm:$0xf]
    %v95 = vld [vmem:[#allocation3 + $0x8c] sm:$0xf]
    %v96 = vld [vmem:[#allocation3 + $0x90] sm:$0xf]
    %v97 = vld [vmem:[#allocation3 + $0x94] sm:$0xf]
    %v98 = vld [vmem:[#allocation3 + $0x98] sm:$0xf]
    %v99 = vld [vmem:[#allocation3 + $0x9c] sm:$0xf]
    %v100 = vld [vmem:[#allocation3 + $0xa0] sm:$0xf]
    %v101 = vld [vmem:[#allocation3 + $0xa4] sm:$0xf]
    %v102 = vld [vmem:[#allocation3 + $0xa8] sm:$0xf]
    %v103 = vld [vmem:[#allocation3 + $0xac] sm:$0xf]
    %v104 = vld [vmem:[#allocation3 + $0xb0] sm:$0xf]
    %v105 = vld [vmem:[#allocation3 + $0xb4] sm:$0xf]
    %v106 = vld [vmem:[#allocation3 + $0xb8] sm:$0xf]
    %v107 = vld [vmem:[#allocation3 + $0xbc] sm:$0xf]
    %v108 = vld [vmem:[#allocation3 + $0xc0] sm:$0xf]
    %v109 = vld [vmem:[#allocation3 + $0xc4] sm:$0xf]
    %v110 = vld [vmem:[#allocation3 + $0xc8] sm:$0xf]
    %v111 = vld [vmem:[#allocation3 + $0xcc] sm:$0xf]
    %v112 = vld [vmem:[#allocation3 + $0xd0] sm:$0xf]
    %v113 = vld [vmem:[#allocation3 + $0xd4] sm:$0xf]
    %v114 = vld [vmem:[#allocation3 + $0xd8] sm:$0xf]
    %v115 = vld [vmem:[#allocation3 + $0xdc] sm:$0xf]
    %v116 = vld [vmem:[#allocation3 + $0xe0] sm:$0xf]
    %v117 = vld [vmem:[#allocation3 + $0xe4] sm:$0xf]
    %v118 = vld [vmem:[#allocation3 + $0xe8] sm:$0xf]
    %v119 = vld [vmem:[#allocation3 + $0xec] sm:$0xf]
    %v120 = vld [vmem:[#allocation3 + $0xf0] sm:$0xf]
    %v121 = vld [vmem:[#allocation3 + $0xf4] sm:$0xf]
    %v122 = vld [vmem:[#allocation3 + $0xf8] sm:$0xf]
    %v123 = vld [vmem:[#allocation3 + $0xfc] sm:$0xf]
    %v124 = vld [vmem:[#allocation3 + $0x100] sm:$0xf]
    %v125 = vld [vmem:[#allocation3 + $0x104] sm:$0xf]
    %v126 = vld [vmem:[#allocation3 + $0x108] sm:$0xf]
    %v127 = vld [vmem:[#allocation3 + $0x10c] sm:$0xf]
    %v128 = vld [vmem:[#allocation3 + $0x110] sm:$0xf]
    %v129 = vld [vmem:[#allocation3 + $0x114] sm:$0xf]
    %v130 = vld [vmem:[#allocation3 + $0x118] sm:$0xf]
    %v131 = vld [vmem:[#allocation3 + $0x11c] sm:$0xf]
    %v132 = vld [vmem:[#allocation3 + $0x120] sm:$0xf]
    %v133 = vld [vmem:[#allocation3 + $0x124] sm:$0xf]
    %v134 = vld [vmem:[#allocation3 + $0x128] sm:$0xf]
    %v135 = vld [vmem:[#allocation3 + $0x12c] sm:$0xf]
    %v136 = vld [vmem:[#allocation3 + $0x130] sm:$0xf]
    %v137 = vld [vmem:[#allocation3 + $0x134] sm:$0xf]
    %v138 = vld [vmem:[#allocation3 + $0x138] sm:$0xf]
    %v139 = vld [vmem:[#allocation3 + $0x13c] sm:$0xf]
    %v140 = vld [vmem:[#allocation3 + $0x140] sm:$0xf]
    %v141 = vld [vmem:[#allocation3 + $0x144] sm:$0xf]
    %v142 = vld [vmem:[#allocation3 + $0x148] sm:$0xf]
    %v143 = vld [vmem:[#allocation3 + $0x14c] sm:$0xf]
    %v144 = vld [vmem:[#allocation3 + $0x150] sm:$0xf]
    %v145 = vld [vmem:[#allocation3 + $0x154] sm:$0xf]
    %v146 = vld [vmem:[#allocation3 + $0x158] sm:$0xf]
    %v147 = vld [vmem:[#allocation3 + $0x15c] sm:$0xf]
    %v148 = vld [vmem:[#allocation3 + $0x160] sm:$0xf]
    %v149 = vld [vmem:[#allocation3 + $0x164] sm:$0xf]
    %v150 = vld [vmem:[#allocation3 + $0x168] sm:$0xf]
    %v151 = vld [vmem:[#allocation3 + $0x16c] sm:$0xf]
    %v152 = vld [vmem:[#allocation3 + $0x170] sm:$0xf]
    %v153 = vld [vmem:[#allocation3 + $0x174] sm:$0xf]
    %v154 = vld [vmem:[#allocation3 + $0x178] sm:$0xf]
    %v155 = vld [vmem:[#allocation3 + $0x17c] sm:$0xf]
    %v156 = vld [vmem:[#allocation3 + $0x180] sm:$0xf]
    %v157 = vld [vmem:[#allocation3 + $0x184] sm:$0xf]
    %v158 = vld [vmem:[#allocation3 + $0x188] sm:$0xf]
    %v159 = vld [vmem:[#allocation3 + $0x18c] sm:$0xf]
    %v160 = vld [vmem:[#allocation3 + $0x190] sm:$0xf]
    %v161 = vld [vmem:[#allocation3 + $0x194] sm:$0xf]
    %v162 = vld [vmem:[#allocation3 + $0x198] sm:$0xf]
    %v163 = vld [vmem:[#allocation3 + $0x19c] sm:$0xf]
    %v164 = vld [vmem:[#allocation3 + $0x1a0] sm:$0xf]
    %v165 = vld [vmem:[#allocation3 + $0x1a4] sm:$0xf]
    %v166 = vld [vmem:[#allocation3 + $0x1a8] sm:$0xf]
    %v167 = vld [vmem:[#allocation3 + $0x1ac] sm:$0xf]
    %v168 = vld [vmem:[#allocation3 + $0x1b0] sm:$0xf]
    %v169 = vld [vmem:[#allocation3 + $0x1b4] sm:$0xf]
    %v170 = vld [vmem:[#allocation3 + $0x1b8] sm:$0xf]
    %v171 = vld [vmem:[#allocation3 + $0x1bc] sm:$0xf]
    %v172 = vld [vmem:[#allocation3 + $0x1c0] sm:$0xf]
    %v173 = vld [vmem:[#allocation3 + $0x1c4] sm:$0xf]
    %v174 = vld [vmem:[#allocation3 + $0x1c8] sm:$0xf]
    %v175 = vld [vmem:[#allocation3 + $0x1cc] sm:$0xf]
    %v176 = vld [vmem:[#allocation3 + $0x1d0] sm:$0xf]
    %v177 = vld [vmem:[#allocation3 + $0x1d4] sm:$0xf]
    %v178 = vld [vmem:[#allocation3 + $0x1d8] sm:$0xf]
    %v179 = vld [vmem:[#allocation3 + $0x1dc] sm:$0xf]
    %v180 = vld [vmem:[#allocation3 + $0x1e0] sm:$0xf]
    %v181 = vld [vmem:[#allocation3 + $0x1e4] sm:$0xf]
    %v182 = vld [vmem:[#allocation3 + $0x1e8] sm:$0xf]
    %v183 = vld [vmem:[#allocation3 + $0x1ec] sm:$0xf]
    %v184 = vld [vmem:[#allocation3 + $0x1f0] sm:$0xf]
    %v185 = vld [vmem:[#allocation3 + $0x1f4] sm:$0xf]
    %v186 = vld [vmem:[#allocation3 + $0x1f8] sm:$0xf]
    %v187 = vld [vmem:[#allocation3 + $0x1fc] sm:$0xf]
    %v316 = vunpack.c.l.b16 %v60
    %v317 = vunpack.c.l.b16 %v61
    %v318 = vunpack.c.l.b16 %v62
    %v319 = vunpack.c.l.b16 %v63
    %v320 = vunpack.c.l.b16 %v64
    %v321 = vunpack.c.l.b16 %v65
    %v322 = vunpack.c.l.b16 %v66
    %v323 = vunpack.c.l.b16 %v67
    %v324 = vunpack.c.l.b16 %v68
    %v325 = vunpack.c.l.b16 %v69
    %v326 = vunpack.c.l.b16 %v70
    %v327 = vunpack.c.l.b16 %v71
    %v328 = vunpack.c.l.b16 %v72
    %v329 = vunpack.c.l.b16 %v73
    %v330 = vunpack.c.l.b16 %v74
    %v331 = vunpack.c.l.b16 %v75
    %v332 = vunpack.c.l.b16 %v76
    %v333 = vunpack.c.l.b16 %v77
    %v334 = vunpack.c.l.b16 %v78
    %v335 = vunpack.c.l.b16 %v79
    %v336 = vunpack.c.l.b16 %v80
    %v337 = vunpack.c.l.b16 %v81
    %v338 = vunpack.c.l.b16 %v82
    %v339 = vunpack.c.l.b16 %v83
    %v340 = vunpack.c.l.b16 %v84
    %v341 = vunpack.c.l.b16 %v85
    %v342 = vunpack.c.l.b16 %v86
    %v343 = vunpack.c.l.b16 %v87
    %v344 = vunpack.c.l.b16 %v88
    %v345 = vunpack.c.l.b16 %v89
    %v346 = vunpack.c.l.b16 %v90
    %v347 = vunpack.c.l.b16 %v91
    %v348 = vunpack.c.l.b16 %v92
    %v349 = vunpack.c.l.b16 %v93
    %v350 = vunpack.c.l.b16 %v94
    %v351 = vunpack.c.l.b16 %v95
    %v352 = vunpack.c.l.b16 %v96
    %v353 = vunpack.c.l.b16 %v97
    %v354 = vunpack.c.l.b16 %v98
    %v355 = vunpack.c.l.b16 %v99
    %v356 = vunpack.c.l.b16 %v100
    %v357 = vunpack.c.l.b16 %v101
    %v358 = vunpack.c.l.b16 %v102
    %v359 = vunpack.c.l.b16 %v103
    %v360 = vunpack.c.l.b16 %v104
    %v361 = vunpack.c.l.b16 %v105
    %v362 = vunpack.c.l.b16 %v106
    %v363 = vunpack.c.l.b16 %v107
    %v364 = vunpack.c.l.b16 %v108
    %v365 = vunpack.c.l.b16 %v109
    %v366 = vunpack.c.l.b16 %v110
    %v367 = vunpack.c.l.b16 %v111
    %v368 = vunpack.c.l.b16 %v112
    %v369 = vunpack.c.l.b16 %v113
    %v370 = vunpack.c.l.b16 %v114
    %v371 = vunpack.c.l.b16 %v115
    %v372 = vunpack.c.l.b16 %v116
    %v373 = vunpack.c.l.b16 %v117
    %v374 = vunpack.c.l.b16 %v118
    %v375 = vunpack.c.l.b16 %v119
    %v376 = vunpack.c.l.b16 %v120
    %v377 = vunpack.c.l.b16 %v121
    %v378 = vunpack.c.l.b16 %v122
    %v379 = vunpack.c.l.b16 %v123
    %v380 = vunpack.c.l.b16 %v124
    %v381 = vunpack.c.l.b16 %v125
    %v382 = vunpack.c.l.b16 %v126
    %v383 = vunpack.c.l.b16 %v127
    %v384 = vunpack.c.l.b16 %v128
    %v385 = vunpack.c.l.b16 %v129
    %v386 = vunpack.c.l.b16 %v130
    %v387 = vunpack.c.l.b16 %v131
    %v388 = vunpack.c.l.b16 %v132
    %v389 = vunpack.c.l.b16 %v133
    %v390 = vunpack.c.l.b16 %v134
    %v391 = vunpack.c.l.b16 %v135
    %v392 = vunpack.c.l.b16 %v136
    %v393 = vunpack.c.l.b16 %v137
    %v394 = vunpack.c.l.b16 %v138
    %v395 = vunpack.c.l.b16 %v139
    %v396 = vunpack.c.l.b16 %v140
    %v397 = vunpack.c.l.b16 %v141
    %v398 = vunpack.c.l.b16 %v142
    %v399 = vunpack.c.l.b16 %v143
    %v400 = vunpack.c.l.b16 %v144
    %v401 = vunpack.c.l.b16 %v145
    %v402 = vunpack.c.l.b16 %v146
    %v403 = vunpack.c.l.b16 %v147
    %v404 = vunpack.c.l.b16 %v148
    %v405 = vunpack.c.l.b16 %v149
    %v406 = vunpack.c.l.b16 %v150
    %v407 = vunpack.c.l.b16 %v151
    %v408 = vunpack.c.l.b16 %v152
    %v409 = vunpack.c.l.b16 %v153
    %v410 = vunpack.c.l.b16 %v154
    %v411 = vunpack.c.l.b16 %v155
    %v412 = vunpack.c.l.b16 %v156
    %v413 = vunpack.c.l.b16 %v157
    %v414 = vunpack.c.l.b16 %v158
    %v415 = vunpack.c.l.b16 %v159
    %v416 = vunpack.c.l.b16 %v160
    %v417 = vunpack.c.l.b16 %v161
    %v418 = vunpack.c.l.b16 %v162
    %v419 = vunpack.c.l.b16 %v163
    %v420 = vunpack.c.l.b16 %v164
    %v421 = vunpack.c.l.b16 %v165
    %v422 = vunpack.c.l.b16 %v166
    %v423 = vunpack.c.l.b16 %v167
    %v424 = vunpack.c.l.b16 %v168
    %v425 = vunpack.c.l.b16 %v169
    %v426 = vunpack.c.l.b16 %v170
    %v427 = vunpack.c.l.b16 %v171
    %v428 = vunpack.c.l.b16 %v172
    %v429 = vunpack.c.l.b16 %v173
    %v430 = vunpack.c.l.b16 %v174
    %v431 = vunpack.c.l.b16 %v175
    %v432 = vunpack.c.l.b16 %v176
    %v433 = vunpack.c.l.b16 %v177
    %v434 = vunpack.c.l.b16 %v178
    %v435 = vunpack.c.l.b16 %v179
    %v436 = vunpack.c.l.b16 %v180
    %v437 = vunpack.c.l.b16 %v181
    %v438 = vunpack.c.l.b16 %v182
    %v439 = vunpack.c.l.b16 %v183
    %v440 = vunpack.c.l.b16 %v184
    %v441 = vunpack.c.l.b16 %v185
    %v442 = vunpack.c.l.b16 %v186
    %v443 = vunpack.c.l.b16 %v187
    %v444 = vpack.c.b16 %v317, %v316
    %v445 = vpack.c.b16 %v319, %v318
    %v446 = vpack.c.b16 %v321, %v320
    %v447 = vpack.c.b16 %v323, %v322
    %v448 = vpack.c.b16 %v325, %v324
    %v449 = vpack.c.b16 %v327, %v326
    %v450 = vpack.c.b16 %v329, %v328
    %v451 = vpack.c.b16 %v331, %v330
    %v452 = vpack.c.b16 %v333, %v332
    %v453 = vpack.c.b16 %v335, %v334
    %v454 = vpack.c.b16 %v337, %v336
    %v455 = vpack.c.b16 %v339, %v338
    %v456 = vpack.c.b16 %v341, %v340
    %v457 = vpack.c.b16 %v343, %v342
    %v458 = vpack.c.b16 %v345, %v344
    %v459 = vpack.c.b16 %v347, %v346
    %v460 = vpack.c.b16 %v349, %v348
    %v461 = vpack.c.b16 %v351, %v350
    %v462 = vpack.c.b16 %v353, %v352
    %v463 = vpack.c.b16 %v355, %v354
    %v464 = vpack.c.b16 %v357, %v356
    %v465 = vpack.c.b16 %v359, %v358
    %v466 = vpack.c.b16 %v361, %v360
    %v467 = vpack.c.b16 %v363, %v362
    %v468 = vpack.c.b16 %v365, %v364
    %v469 = vpack.c.b16 %v367, %v366
    %v470 = vpack.c.b16 %v369, %v368
    %v471 = vpack.c.b16 %v371, %v370
    %v472 = vpack.c.b16 %v373, %v372
    %v473 = vpack.c.b16 %v375, %v374
    %v474 = vpack.c.b16 %v377, %v376
    %v475 = vpack.c.b16 %v379, %v378
    %v476 = vpack.c.b16 %v381, %v380
    %v477 = vpack.c.b16 %v383, %v382
    %v478 = vpack.c.b16 %v385, %v384
    %v479 = vpack.c.b16 %v387, %v386
    %v480 = vpack.c.b16 %v389, %v388
    %v481 = vpack.c.b16 %v391, %v390
    %v482 = vpack.c.b16 %v393, %v392
    %v483 = vpack.c.b16 %v395, %v394
    %v484 = vpack.c.b16 %v397, %v396
    %v485 = vpack.c.b16 %v399, %v398
    %v486 = vpack.c.b16 %v401, %v400
    %v487 = vpack.c.b16 %v403, %v402
    %v488 = vpack.c.b16 %v405, %v404
    %v489 = vpack.c.b16 %v407, %v406
    %v490 = vpack.c.b16 %v409, %v408
    %v491 = vpack.c.b16 %v411, %v410
    %v492 = vpack.c.b16 %v413, %v412
    %v493 = vpack.c.b16 %v415, %v414
    %v494 = vpack.c.b16 %v417, %v416
    %v495 = vpack.c.b16 %v419, %v418
    %v496 = vpack.c.b16 %v421, %v420
    %v497 = vpack.c.b16 %v423, %v422
    %v498 = vpack.c.b16 %v425, %v424
    %v499 = vpack.c.b16 %v427, %v426
    %v500 = vpack.c.b16 %v429, %v428
    %v501 = vpack.c.b16 %v431, %v430
    %v502 = vpack.c.b16 %v433, %v432
    %v503 = vpack.c.b16 %v435, %v434
    %v504 = vpack.c.b16 %v437, %v436
    %v505 = vpack.c.b16 %v439, %v438
    %v506 = vpack.c.b16 %v441, %v440
    %v507 = vpack.c.b16 %v443, %v442
    %572 = vmatpush.bf16.msra.mxu0 %v451
    %573 = vmatpush.bf16.msra.mxu0 %v450
    %574 = vmatpush.bf16.msra.mxu0 %v449
    %575 = vmatpush.bf16.msra.mxu0 %v448
    %576 = vmatpush.bf16.msra.mxu0 %v447
    %577 = vmatpush.bf16.msra.mxu0 %v446
    %578 = vmatpush.bf16.msra.mxu0 %v445
    %579 = vmatpush.bf16.msra.mxu0 %v444
    %580 = vmatmul.bf16.gmra.mxu0 %v52
    %v581 = vpop.f32.mrf.mxu0
    %v582 = vadd.f32 0.0, %v581
    %v583 = vpop.f32.mrf.mxu0
    %v584 = vadd.f32 0.0, %v583
    %585 = vdwg.mxu0
    %586 = vmatpush.bf16.msra.mxu0 %v459
    %587 = vmatpush.bf16.msra.mxu0 %v458
    %588 = vmatpush.bf16.msra.mxu0 %v457
    %589 = vmatpush.bf16.msra.mxu0 %v456
    %590 = vmatpush.bf16.msra.mxu0 %v455
    %591 = vmatpush.bf16.msra.mxu0 %v454
    %592 = vmatpush.bf16.msra.mxu0 %v453
    %593 = vmatpush.bf16.msra.mxu0 %v452
    %594 = vmatmul.bf16.gmra.mxu0 %v53
    %v595 = vpop.f32.mrf.mxu0
    %v596 = vadd.f32 %v582, %v595
    %v597 = vpop.f32.mrf.mxu0
    %v598 = vadd.f32 %v584, %v597
    %599 = vdwg.mxu0
    %600 = vmatpush.bf16.msra.mxu0 %v467
    %601 = vmatpush.bf16.msra.mxu0 %v466
    %602 = vmatpush.bf16.msra.mxu0 %v465
    %603 = vmatpush.bf16.msra.mxu0 %v464
    %604 = vmatpush.bf16.msra.mxu0 %v463
    %605 = vmatpush.bf16.msra.mxu0 %v462
    %606 = vmatpush.bf16.msra.mxu0 %v461
    %607 = vmatpush.bf16.msra.mxu0 %v460
    %608 = vmatmul.bf16.gmra.mxu0 %v54
    %v609 = vpop.f32.mrf.mxu0
    %v610 = vadd.f32 %v596, %v609
    %v611 = vpop.f32.mrf.mxu0
    %v612 = vadd.f32 %v598, %v611
    %613 = vdwg.mxu0
    %614 = vmatpush.bf16.msra.mxu0 %v475
    %615 = vmatpush.bf16.msra.mxu0 %v474
    %616 = vmatpush.bf16.msra.mxu0 %v473
    %617 = vmatpush.bf16.msra.mxu0 %v472
    %618 = vmatpush.bf16.msra.mxu0 %v471
    %619 = vmatpush.bf16.msra.mxu0 %v470
    %620 = vmatpush.bf16.msra.mxu0 %v469
    %621 = vmatpush.bf16.msra.mxu0 %v468
    %622 = vmatmul.bf16.gmra.mxu0 %v55
    %v623 = vpop.f32.mrf.mxu0
    %v624 = vadd.f32 %v610, %v623
    %v625 = vpop.f32.mrf.mxu0
    %v626 = vadd.f32 %v612, %v625
    %627 = vdwg.mxu0
    %628 = vmatpush.bf16.msra.mxu0 %v483
    %629 = vmatpush.bf16.msra.mxu0 %v482
    %630 = vmatpush.bf16.msra.mxu0 %v481
    %631 = vmatpush.bf16.msra.mxu0 %v480
    %632 = vmatpush.bf16.msra.mxu0 %v479
    %633 = vmatpush.bf16.msra.mxu0 %v478
    %634 = vmatpush.bf16.msra.mxu0 %v477
    %635 = vmatpush.bf16.msra.mxu0 %v476
    %636 = vmatmul.bf16.gmra.mxu0 %v56
    %v637 = vpop.f32.mrf.mxu0
    %v638 = vadd.f32 %v624, %v637
    %v639 = vpop.f32.mrf.mxu0
    %v640 = vadd.f32 %v626, %v639
    %641 = vdwg.mxu0
    %642 = vmatpush.bf16.msra.mxu0 %v491
    %643 = vmatpush.bf16.msra.mxu0 %v490
    %644 = vmatpush.bf16.msra.mxu0 %v489
    %645 = vmatpush.bf16.msra.mxu0 %v488
    %646 = vmatpush.bf16.msra.mxu0 %v487
    %647 = vmatpush.bf16.msra.mxu0 %v486
    %648 = vmatpush.bf16.msra.mxu0 %v485
    %649 = vmatpush.bf16.msra.mxu0 %v484
    %650 = vmatmul.bf16.gmra.mxu0 %v57
    %v651 = vpop.f32.mrf.mxu0
    %v652 = vadd.f32 %v638, %v651
    %v653 = vpop.f32.mrf.mxu0
    %v654 = vadd.f32 %v640, %v653
    %655 = vdwg.mxu0
    %656 = vmatpush.bf16.msra.mxu0 %v499
    %657 = vmatpush.bf16.msra.mxu0 %v498
    %658 = vmatpush.bf16.msra.mxu0 %v497
    %659 = vmatpush.bf16.msra.mxu0 %v496
    %660 = vmatpush.bf16.msra.mxu0 %v495
    %661 = vmatpush.bf16.msra.mxu0 %v494
    %662 = vmatpush.bf16.msra.mxu0 %v493
    %663 = vmatpush.bf16.msra.mxu0 %v492
    %664 = vmatmul.bf16.gmra.mxu0 %v58
    %v665 = vpop.f32.mrf.mxu0
    %v666 = vadd.f32 %v652, %v665
    %v667 = vpop.f32.mrf.mxu0
    %v668 = vadd.f32 %v654, %v667
    %669 = vdwg.mxu0
    %670 = vmatpush.bf16.msra.mxu0 %v507
    %671 = vmatpush.bf16.msra.mxu0 %v506
    %672 = vmatpush.bf16.msra.mxu0 %v505
    %673 = vmatpush.bf16.msra.mxu0 %v504
    %674 = vmatpush.bf16.msra.mxu0 %v503
    %675 = vmatpush.bf16.msra.mxu0 %v502
    %676 = vmatpush.bf16.msra.mxu0 %v501
    %677 = vmatpush.bf16.msra.mxu0 %v500
    %678 = vmatmul.bf16.gmra.mxu0 %v59
    %v679 = vpop.f32.mrf.mxu0
    %v680 = vadd.f32 %v666, %v679
    %v681 = vpop.f32.mrf.mxu0
    %v682 = vadd.f32 %v668, %v681
    %683 = vdwg.mxu0
    %p684 = scmp.eq.s32.totalorder 0, 0
    // Predicated region
    $region26: #{_two_mlp_head_impl.1} parent=1 // pred_check
      %p685 = pneg %p684
    $region27: #{_two_mlp_head_impl.1} parent=1 // pred_check_branch
      %687 = sbr.rel (%p685) target = $region29
    $region28: #{_two_mlp_head_impl.1} parent=1 // pred_region
      %688 = vst [vmem:[#allocation2] sm:$0xff] %v680
      %689 = vst [vmem:[#allocation2 + $0x8] sm:$0xff] %v682
    $region29: #{_two_mlp_head_impl.1} parent=1 // pred_fallthru
      _
    %p690 = scmp.gt.s32.totalorder 0, 0
    // Predicated region
    $region30: #{_two_mlp_head_impl.1} parent=1 // pred_check
      %p691 = pneg %p690
    $region31: #{_two_mlp_head_impl.1} parent=1 // pred_check_branch
      %693 = sbr.rel (%p691) target = $region33
    $region32: #{_two_mlp_head_impl.1} parent=1 // pred_region
      %v694 = vld [vmem:[#allocation2] sm:$0xff]
      %v695 = vld [vmem:[#allocation2 + $0x8] sm:$0xff]
      %v696 = vadd.f32 %v694, %v680
      %v697 = vadd.f32 %v695, %v682
      %698 = vst [vmem:[#allocation2] sm:$0xff] %v696
      %699 = vst [vmem:[#allocation2 + $0x8] sm:$0xff] %v697
    $region33: #{_two_mlp_head_impl.1} parent=1 // pred_fallthru
      _
    // Predicated region
    $region34: #{_two_mlp_head_impl.1} parent=1 // pred_check
      %p700 = pneg %p684
    $region35: #{_two_mlp_head_impl.1} parent=1 // pred_check_branch
      %702 = sbr.rel (%p700) target = $region37
    $region36: #{_two_mlp_head_impl.1} parent=1 // pred_region
      %v703 = vld [vmem:[#allocation2] sm:$0xff]
      %v704 = vld [vmem:[#allocation2 + $0x8] sm:$0xff]
      %v705 = vld [vmem:[%s2] sm:$0x1]
      %v707 = vperm.slane %v705, 0
      %v709 = vadd.f32 %v703, %v707
      %v710 = vadd.f32 %v704, %v707
      %v711 = vmax.f32 %v709, 0.0
      %v712 = vmax.f32 %v710, 0.0
      %v713 = vpack.c.bf16 %v712, %v711
      %v714 = vld [vmem:[%s3] sm:$0xf]
      %v715 = vld [vmem:[%s3 + $0x4] sm:$0xf]
      %v716 = vld [vmem:[%s3 + $0x8] sm:$0xf]
      %v717 = vld [vmem:[%s3 + $0xc] sm:$0xf]
      %v718 = vld [vmem:[%s3 + $0x10] sm:$0xf]
      %v719 = vld [vmem:[%s3 + $0x14] sm:$0xf]
      %v720 = vld [vmem:[%s3 + $0x18] sm:$0xf]
      %v721 = vld [vmem:[%s3 + $0x1c] sm:$0xf]
      %v722 = vld [vmem:[%s3 + $0x20] sm:$0xf]
      %v723 = vld [vmem:[%s3 + $0x24] sm:$0xf]
      %v724 = vld [vmem:[%s3 + $0x28] sm:$0xf]
      %v725 = vld [vmem:[%s3 + $0x2c] sm:$0xf]
      %v726 = vld [vmem:[%s3 + $0x30] sm:$0xf]
      %v727 = vld [vmem:[%s3 + $0x34] sm:$0xf]
      %v728 = vld [vmem:[%s3 + $0x38] sm:$0xf]
      %v729 = vld [vmem:[%s3 + $0x3c] sm:$0xf]
      %v730 = vld [vmem:[%s4] sm:$0x1]
      %v732 = vperm.slane %v730, 0
      %v750 = vunpack.c.l.b16 %v714
      %v751 = vunpack.c.l.b16 %v715
      %v752 = vunpack.c.l.b16 %v716
      %v753 = vunpack.c.l.b16 %v717
      %v754 = vunpack.c.l.b16 %v718
      %v755 = vunpack.c.l.b16 %v719
      %v756 = vunpack.c.l.b16 %v720
      %v757 = vunpack.c.l.b16 %v721
      %v758 = vunpack.c.l.b16 %v722
      %v759 = vunpack.c.l.b16 %v723
      %v760 = vunpack.c.l.b16 %v724
      %v761 = vunpack.c.l.b16 %v725
      %v762 = vunpack.c.l.b16 %v726
      %v763 = vunpack.c.l.b16 %v727
      %v764 = vunpack.c.l.b16 %v728
      %v765 = vunpack.c.l.b16 %v729
      %v766 = vpack.c.b16 %v751, %v750
      %v767 = vpack.c.b16 %v753, %v752
      %v768 = vpack.c.b16 %v755, %v754
      %v769 = vpack.c.b16 %v757, %v756
      %v770 = vpack.c.b16 %v759, %v758
      %v771 = vpack.c.b16 %v761, %v760
      %v772 = vpack.c.b16 %v763, %v762
      %v773 = vpack.c.b16 %v765, %v764
      %782 = vmatpush.bf16.msra.mxu0 %v773
      %783 = vmatpush.bf16.msra.mxu0 %v772
      %784 = vmatpush.bf16.msra.mxu0 %v771
      %785 = vmatpush.bf16.msra.mxu0 %v770
      %786 = vmatpush.bf16.msra.mxu0 %v769
      %787 = vmatpush.bf16.msra.mxu0 %v768
      %788 = vmatpush.bf16.msra.mxu0 %v767
      %789 = vmatpush.bf16.msra.mxu0 %v766
      %790 = vmatmul.bf16.gmra.mxu0 %v713
      %v791 = vpop.f32.mrf.mxu0
      %v792 = vadd.f32 %v732, %v791
      %v793 = vpop.f32.mrf.mxu0
      %v794 = vadd.f32 %v732, %v793
      %795 = vdwg.mxu0
      %v796 = vmax.f32 %v792, 0.0
      %v797 = vmax.f32 %v794, 0.0
      %798 = vst [vmem:[%s5] sm:$0xff] %v796
      %799 = vst [vmem:[%s5 + $0x8] sm:$0xff] %v797
    $region37: #{_two_mlp_head_impl.1} parent=1 // pred_fallthru
      _
    // Predicated region
    $region38: #{_two_mlp_head_impl.1} parent=1 // pred_check
      _
    $region39: #{_two_mlp_head_impl.1} parent=1 // pred_check_branch
      %801 = sbr.rel (0) target = $region41
    $region40: #{_two_mlp_head_impl.1} parent=1 // pred_region
      _
    $region41: #{_two_mlp_head_impl.1} parent=1 // pred_fallthru
      _
    // Predicated region
    $region42: #{_two_mlp_head_impl.1} parent=1 // pred_check
      _
    $region43: #{_two_mlp_head_impl.1} parent=1 // pred_check_branch
      %803 = sbr.rel (0) target = $region45
    $region44: #{_two_mlp_head_impl.1} parent=1 // pred_region
      _
    $region45: #{_two_mlp_head_impl.1} parent=1 // pred_fallthru
      _
    %804 = vsyncpa [#allocation4], 1

</llo_original>
